<compile_context>
chip_gen: v7x
topology: tpu7x:2x2x1
jax: 0.10.0
libtpu: 0.0.40
codegen_flags: <defaults>
</compile_context>

<pallas_src>
import functools

import jax
import jax.numpy as jnp
from jax.experimental import pallas as pl
from jax.experimental.pallas import tpu as pltpu

VMEM_LIMIT = 32 * 1024 * 1024          # works on v5e/v6e/v7x
_FUSED_VMEM_BUDGET = 14 * 1024 * 1024  # soft per-step VMEM target (fused conv)
_FUSED_M_EFF_CAP = 1536                # bounds per-step unrolled MXU work


def _round_up(x, m):
    return ((x + m - 1) // m) * m


def _fold_bn(b, gamma, beta, mean, var, eps=1e-5):
    inv = gamma / jnp.sqrt(var + eps)
    scale = inv.astype(jnp.float32)
    bias = (beta - mean * inv + b * inv).astype(jnp.float32)
    return scale, bias


# ----------------------------------------------------------------------------
# Pallas kernel 1: tiled matmul with fused affine (BN) + optional ReLU epilogue
# (used for small-spatial 3x3 convs via im2col, 1x1 conv and ConvTranspose)
# ----------------------------------------------------------------------------
def _matmul_affine_kernel(a_ref, b_ref, s_ref, c_ref, o_ref, acc_ref, *, relu):
    k = pl.program_id(2)

    @pl.when(k == 0)
    def _():
        acc_ref[...] = jnp.zeros_like(acc_ref)

    acc_ref[...] += jnp.dot(a_ref[...], b_ref[...],
                            preferred_element_type=jnp.float32)

    @pl.when(k == pl.num_programs(2) - 1)
    def _():
        y = acc_ref[...] * s_ref[...] + c_ref[...]
        if relu:
            y = jnp.maximum(y, 0.0)
        o_ref[...] = y.astype(o_ref.dtype)


def matmul_affine(a, b, scale, bias, relu, out_dtype=jnp.bfloat16):
    """act((a @ b) * scale + bias): bf16 operands, f32 accumulation on the MXU."""
    M, K = a.shape
    N = b.shape[1]
    a = a.astype(jnp.bfloat16)
    b = b.astype(jnp.bfloat16)
    scale = scale.astype(jnp.float32).reshape(1, N)
    bias = bias.astype(jnp.float32).reshape(1, N)

    # Only tiny K / N (final 1x1 conv etc.) get padded up to one MXU chunk.
    if K < 128:
        a = jnp.pad(a, ((0, 0), (0, 128 - K)))
        b = jnp.pad(b, ((0, 128 - K), (0, 0)))
        K = 128
    Np = N
    if N < 128:
        Np = 128
        b = jnp.pad(b, ((0, 0), (0, Np - N)))
        scale = jnp.pad(scale, ((0, 0), (0, Np - N)))
        bias = jnp.pad(bias, ((0, 0), (0, Np - N)))

    # Per-call tile selection (no padding of K / N needed for this network).
    TM = min(1024, _round_up(M, 8))
    if Np <= 256:
        TN = Np
    elif Np % 256 == 0:
        TN = 256           # matches 256-wide MXU; >=2 parallel N tiles for v7x
    else:
        TN = Np
    if K <= 1152:
        TK = K
    else:
        TK = K
        for cand in (1152, 1024, 896, 768, 640, 576, 512, 448, 384, 320, 256,
                     192, 128):
            if K % cand == 0:
                TK = cand
                break

    grid = (pl.cdiv(M, TM), Np // TN, K // TK)

    out = pl.pallas_call(
        functools.partial(_matmul_affine_kernel, relu=relu),
        out_shape=jax.ShapeDtypeStruct((M, Np), out_dtype),
        grid=grid,
        in_specs=[
            pl.BlockSpec((TM, TK), lambda i, j, k: (i, k)),
            pl.BlockSpec((TK, TN), lambda i, j, k: (k, j)),
            pl.BlockSpec((1, TN), lambda i, j, k: (0, j)),
            pl.BlockSpec((1, TN), lambda i, j, k: (0, j)),
        ],
        out_specs=pl.BlockSpec((TM, TN), lambda i, j, k: (i, j)),
        scratch_shapes=[pltpu.VMEM((TM, TN), jnp.float32)],
        compiler_params=pltpu.CompilerParams(
            dimension_semantics=("parallel", "parallel", "arbitrary"),
            vmem_limit_bytes=VMEM_LIMIT),
    )(a, b, scale, bias)
    if Np != N:
        out = out[:, :N]
    return out


# ----------------------------------------------------------------------------
# Pallas kernel 2: fused 3x3 valid conv + BN + ReLU (no im2col in HBM).
# Input is the row-flattened NHWC tensor (N, H*Ws, Cin); each grid step reads a
# row-block plus a 2-row halo (second block of the same array) and forms the
# nine taps in VMEM as shifted slices of the flattened slab.
# ----------------------------------------------------------------------------
def _conv3x3_kernel(cur_ref, halo_ref, w_ref, s_ref, b_ref, o_ref, *, ws):
    m = cur_ref.shape[1]
    cin = cur_ref.shape[2]
    slab = jnp.concatenate(
        [cur_ref[0], halo_ref[0], jnp.zeros((8, cin), cur_ref.dtype)], axis=0)
    acc = jnp.zeros((m, o_ref.shape[-1]), jnp.float32)
    for di in range(3):
        for dj in range(3):
            off = di * ws + dj
            acc = acc + jnp.dot(slab[off:off + m, :], w_ref[3 * di + dj],
                                preferred_element_type=jnp.float32)
    y = acc * s_ref[...] + b_ref[...]
    o_ref[0] = jnp.maximum(y, 0.0).astype(o_ref.dtype)


def _pick_rb(ho, ws, cin, cout):
    """Largest even divisor of `ho` under VMEM / unrolled-MXU-work budgets."""
    kmul = max(1, cin // 128) * max(1, cout // 128)
    best = 2
    for rb in range(2, ho + 1, 2):
        if ho % rb:
            continue
        m = rb * ws
        est = (2 * m * cin * 2 + 4 * ws * cin * 2 + (m + 2 * ws + 8) * cin * 2
               + m * cin * 2 + m * cout * 4 + 2 * m * cout * 2
               + 2 * 9 * cin * cout * 2)
        if m * kmul <= _FUSED_M_EFF_CAP and est <= _FUSED_VMEM_BUDGET:
            best = rb
    return best


def conv3x3_fused(x, wvalid, w, b, gamma, beta, mean, var,
                  out_dtype=jnp.bfloat16):
    """3x3 valid conv + eval-BN + ReLU on a width-strided NHWC tensor.

    x: (N, H, Ws, Cin); only columns [0, wvalid) are meaningful.  Returns
    (y, wvalid-2) with y: (N, H-2, Ws, Cout); columns >= wvalid-2 are junk.
    """
    N, H, Ws, Cin = x.shape
    Cout = w.shape[0]
    Ho = H - 2
    assert Ho % 2 == 0 and Ws % 4 == 0

    x = x.astype(jnp.bfloat16)
    wk = jnp.transpose(w, (2, 3, 1, 0)).reshape(9, Cin, Cout)
    if Cin < 8:                                  # pad tiny channel counts
        pad = 8 - Cin
        x = jnp.pad(x, ((0, 0), (0, 0), (0, 0), (0, pad)))
        wk = jnp.pad(wk, ((0, 0), (0, pad), (0, 0)))
        Cin = 8
    wk = wk.astype(jnp.bfloat16)

    scale, bias = _fold_bn(b, gamma, beta, mean, var)
    scale = scale.reshape(1, Cout)
    bias = bias.reshape(1, Cout)

    rb = _pick_rb(Ho, Ws, Cin, Cout)
    assert Ho % rb == 0 and rb % 2 == 0
    m = rb * Ws
    half = rb // 2
    x_flat = x.reshape(N, H * Ws, Cin)           # free reshape

    out = pl.pallas_call(
        functools.partial(_conv3x3_kernel, ws=Ws),
        out_shape=jax.ShapeDtypeStruct((N, Ho * Ws, Cout), out_dtype),
        grid=(N, Ho // rb),
        in_specs=[
            pl.BlockSpec((1, m, Cin), lambda n, r: (n, r, 0)),
            pl.BlockSpec((1, 2 * Ws, Cin), lambda n, r: (n, (r + 1) * half, 0)),
            pl.BlockSpec((9, Cin, Cout), lambda n, r: (0, 0, 0)),
            pl.BlockSpec((1, Cout), lambda n, r: (0, 0)),
            pl.BlockSpec((1, Cout), lambda n, r: (0, 0)),
        ],
        out_specs=pl.BlockSpec((1, m, Cout), lambda n, r: (n, r, 0)),
        compiler_params=pltpu.CompilerParams(
            dimension_semantics=("parallel", "parallel"),
            vmem_limit_bytes=VMEM_LIMIT),
    )(x_flat, x_flat, wk, scale, bias)

    return out.reshape(N, Ho, Ws, Cout), wvalid - 2


# ----------------------------------------------------------------------------
# Layer ops
# ----------------------------------------------------------------------------
def conv3x3_small(x, w, b, gamma, beta, mean, var, out_dtype=jnp.bfloat16):
    """im2col path for small-spatial layers (decoder / enc4): tensors tiny."""
    N, H, W, Cin = x.shape
    Cout = w.shape[0]
    Ho, Wo = H - 2, W - 2
    x = x.astype(jnp.bfloat16)
    patches = jnp.concatenate(
        [x[:, di:di + Ho, dj:dj + Wo, :] for di in range(3) for dj in range(3)],
        axis=-1)
    a = patches.reshape(N * Ho * Wo, 9 * Cin)
    w_mat = jnp.transpose(w, (2, 3, 1, 0)).reshape(9 * Cin, Cout)
    scale, bias = _fold_bn(b, gamma, beta, mean, var)
    y = matmul_affine(a, w_mat, scale, bias, relu=True, out_dtype=out_dtype)
    return y.reshape(N, Ho, Wo, Cout)


def conv_bn_relu(x, wvalid, p_conv, p_bn):
    """Dispatch: fused kernel for large-spatial layers, im2col otherwise."""
    w, b = p_conv
    N, H, Ws, Cin = x.shape
    Ho, Wo = H - 2, wvalid - 2
    use_fused = (Ho * Wo >= 1024) and (Ws % 4 == 0) and (Ho % 2 == 0)
    if use_fused:
        return conv3x3_fused(x, wvalid, w, b, **p_bn)
    if Ws != wvalid:
        x = x[:, :, :wvalid, :]
    return conv3x3_small(x, w, b, **p_bn), Wo


def conv1x1(x, w, b):
    N, H, W, Cin = x.shape
    Cout = w.shape[0]
    a = x.reshape(N * H * W, Cin)
    w_mat = w.reshape(Cout, Cin).T
    y = matmul_affine(a, w_mat, jnp.ones((Cout,), jnp.float32), b,
                      relu=False, out_dtype=jnp.float32)
    return y.reshape(N, H, W, Cout)


def conv_transpose2x2(x, w, b):
    """ConvTranspose2d(kernel=2, stride=2), PyTorch weight layout (Cin,Cout,2,2)."""
    N, H, W, Cin = x.shape
    Cout = w.shape[1]
    a = x.reshape(N * H * W, Cin)
    w_mat = jnp.transpose(w, (0, 2, 3, 1)).reshape(Cin, 4 * Cout)
    bias = jnp.tile(b, 4)
    y = matmul_affine(a, w_mat, jnp.ones((4 * Cout,), jnp.float32), bias,
                      relu=False, out_dtype=jnp.bfloat16)
    y = y.reshape(N, H, W, 2, 2, Cout)
    y = jnp.transpose(y, (0, 1, 3, 2, 4, 5)).reshape(N, 2 * H, 2 * W, Cout)
    return y


def maxpool2x2(x, wvalid):
    N, H, Ws, C = x.shape
    v = x[:, :, :wvalid, :] if Ws != wvalid else x
    return v.reshape(N, H // 2, 2, wvalid // 2, 2, C).max(axis=(2, 4))


def upsample_bilinear(x, size):
    N, _, _, C = x.shape
    return jax.image.resize(x, (N, int(size[0]), int(size[1]), C),
                            method='bilinear')


# ----------------------------------------------------------------------------
# Parameters (deterministic synthetic init, PyTorch layouts)
# ----------------------------------------------------------------------------
def _conv_params(key, cin, cout, k):
    std = (2.0 / (cin * k * k)) ** 0.5
    w = jax.random.normal(key, (cout, cin, k, k), jnp.float32) * std
    b = jnp.zeros((cout,), jnp.float32)
    return w, b


def _bn_params(c):
    return dict(gamma=jnp.ones((c,), jnp.float32),
                beta=jnp.zeros((c,), jnp.float32),
                mean=jnp.zeros((c,), jnp.float32),
                var=jnp.ones((c,), jnp.float32))


def make_encoder(key, cin, cout):
    k1, k2 = jax.random.split(key)
    return dict(conv1=_conv_params(k1, cin, cout, 3), bn1=_bn_params(cout),
                conv2=_conv_params(k2, cout, cout, 3), bn2=_bn_params(cout))


def make_decoder(key, cin, cmid, cout):
    k1, k2, k3 = jax.random.split(key, 3)
    wt = jax.random.normal(k3, (cmid, cout, 2, 2), jnp.float32) * (1.0 / (4 * cmid)) ** 0.5
    bt = jnp.zeros((cout,), jnp.float32)
    return dict(conv1=_conv_params(k1, cin, cmid, 3), bn1=_bn_params(cmid),
                conv2=_conv_params(k2, cmid, cmid, 3), bn2=_bn_params(cmid),
                convt=(wt, bt))


def make_unet_params(key, n_classes=21):
    ks = jax.random.split(key, 12)
    p = dict()
    p['enc1'] = make_encoder(ks[0], 3, 64)
    p['enc2'] = make_encoder(ks[1], 64, 128)
    p['enc3'] = make_encoder(ks[2], 128, 256)
    p['enc4'] = make_encoder(ks[3], 256, 512)          # dropout -> identity (eval)
    p['center'] = make_decoder(ks[4], 512, 1024, 512)
    p['dec4'] = make_decoder(ks[5], 1024, 512, 256)
    p['dec3'] = make_decoder(ks[6], 512, 256, 128)
    p['dec2'] = make_decoder(ks[7], 256, 128, 64)
    p['dec1'] = dict(conv1=_conv_params(ks[8], 128, 64, 3), bn1=_bn_params(64),
                     conv2=_conv_params(ks[9], 64, 64, 3), bn2=_bn_params(64))
    p['final'] = _conv_params(ks[10], 64, n_classes, 1)
    return p


# ----------------------------------------------------------------------------
# Forward pass
# ----------------------------------------------------------------------------
def encoder_forward(p, x):
    h, wv = conv_bn_relu(x, x.shape[2], p['conv1'], p['bn1'])
    h, wv = conv_bn_relu(h, wv, p['conv2'], p['bn2'])
    return maxpool2x2(h, wv)


def decoder_forward(p, x):
    h, wv = conv_bn_relu(x, x.shape[2], p['conv1'], p['bn1'])
    h, wv = conv_bn_relu(h, wv, p['conv2'], p['bn2'])
    if h.shape[2] != wv:
        h = h[:, :, :wv, :]
    return conv_transpose2x2(h, *p['convt'])


def unet_forward(params, x_nchw):
    x = jnp.transpose(x_nchw, (0, 2, 3, 1)).astype(jnp.float32)  # NCHW -> NHWC
    enc1 = encoder_forward(params['enc1'], x)
    enc2 = encoder_forward(params['enc2'], enc1)
    enc3 = encoder_forward(params['enc3'], enc2)
    enc4 = encoder_forward(params['enc4'], enc3)
    center = decoder_forward(params['center'], enc4)
    dec4 = decoder_forward(
        params['dec4'],
        jnp.concatenate([center, upsample_bilinear(enc4, center.shape[1:3])], axis=-1))
    dec3 = decoder_forward(
        params['dec3'],
        jnp.concatenate([dec4, upsample_bilinear(enc3, dec4.shape[1:3])], axis=-1))
    dec2 = decoder_forward(
        params['dec2'],
        jnp.concatenate([dec3, upsample_bilinear(enc2, dec3.shape[1:3])], axis=-1))
    d1 = jnp.concatenate([dec2, upsample_bilinear(enc1, dec2.shape[1:3])], axis=-1)
    h, wv = conv_bn_relu(d1, d1.shape[2], params['dec1']['conv1'], params['dec1']['bn1'])
    h, wv = conv_bn_relu(h, wv, params['dec1']['conv2'], params['dec1']['bn2'])
    if h.shape[2] != wv:
        h = h[:, :, :wv, :]
    final = conv1x1(h, *params['final'])
    out = upsample_bilinear(final, x.shape[1:3])
    return jnp.transpose(out, (0, 3, 1, 2))  # NHWC -> NCHW


# ----------------------------------------------------------------------------
if __name__ == "__main__":
    # --- small self-checks of the Pallas kernels vs. plain-JAX references ---
    kt = jax.random.split(jax.random.PRNGKey(2), 6)
    xa = jax.random.normal(kt[0], (40, 200), jnp.float32)
    xb = jax.random.normal(kt[1], (200, 72), jnp.float32) * 0.1
    sc = jax.random.uniform(kt[2], (72,), jnp.float32, minval=0.5, maxval=1.5)
    bi = jax.random.normal(kt[3], (72,), jnp.float32)
    got = matmul_affine(xa, xb, sc, bi, relu=True, out_dtype=jnp.float32)
    ref = jnp.maximum(
        (xa.astype(jnp.bfloat16).astype(jnp.float32)
         @ xb.astype(jnp.bfloat16).astype(jnp.float32)) * sc + bi, 0.0)
    err = jnp.linalg.norm(got - ref) / (jnp.linalg.norm(ref) + 1e-6)
    assert float(err) < 2e-2, f"matmul_affine mismatch: {float(err)}"

    xc = jax.random.normal(kt[4], (1, 26, 28, 3), jnp.float32)
    wc, bc = _conv_params(kt[5], 3, 64, 3)
    bn = dict(gamma=jnp.full((64,), 1.3, jnp.float32),
              beta=jnp.full((64,), 0.1, jnp.float32),
              mean=jnp.full((64,), 0.05, jnp.float32),
              var=jnp.full((64,), 0.8, jnp.float32))
    got4, wv = conv3x3_fused(xc, 28, wc, bc, **bn)
    got4 = got4[:, :, :wv, :].astype(jnp.float32)
    xbf = xc.astype(jnp.bfloat16).astype(jnp.float32)
    wbf = wc.astype(jnp.bfloat16).astype(jnp.float32)
    refc = jax.lax.conv_general_dilated(
        xbf, jnp.transpose(wbf, (2, 3, 1, 0)), (1, 1), 'VALID',
        dimension_numbers=('NHWC', 'HWIO', 'NHWC')) + bc
    inv = bn['gamma'] / jnp.sqrt(bn['var'] + 1e-5)
    refc = jnp.maximum((refc - bn['mean']) * inv + bn['beta'], 0.0)
    errc = jnp.linalg.norm(got4 - refc) / (jnp.linalg.norm(refc) + 1e-6)
    assert float(errc) < 2e-2, f"fused conv mismatch: {float(errc)}"

    # --- full UNet forward ---
    key = jax.random.PRNGKey(0)
    kp, kx = jax.random.split(key)
    params = make_unet_params(kp, n_classes=21)

    # 188 is the smallest spatial size for which this (valid-conv) UNet's
    # encoder/decoder chain produces valid shapes with even pooling.
    x = jax.random.normal(kx, (2, 3, 188, 188), jnp.float32)

    fwd = jax.jit(unet_forward)
    out = fwd(params, x)
    jax.block_until_ready(out)

    assert out.shape == (2, 21, 188, 188), out.shape
    assert bool(jnp.all(jnp.isfinite(out))), "non-finite output"
    print("KERNEL_OK")
</pallas_src>

<mosaic_0001>
module attributes {stable_mosaic.version = 11 : i64} {
  func.func @_matmul_affine_kernel(%arg0: i32, %arg1: i32, %arg2: i32, %arg3: memref<40x200xbf16, #tpu.memory_space<vmem>>, %arg4: memref<200x128xbf16, #tpu.memory_space<vmem>>, %arg5: memref<1x128xf32, #tpu.memory_space<vmem>>, %arg6: memref<1x128xf32, #tpu.memory_space<vmem>>, %arg7: memref<40x128xf32, #tpu.memory_space<vmem>>, %arg8: memref<40x128xf32, #tpu.memory_space<vmem>>) attributes {dimension_semantics = [#tpu.dimension_semantics<parallel>, #tpu.dimension_semantics<parallel>, #tpu.dimension_semantics<arbitrary>], iteration_bounds = array<i64: 1, 1, 1>, scalar_prefetch = 0 : i64, scratch_operands = 1 : i64, tpu.core_type = #tpu.core_type<tc>, window_params = [{transform_indices = @transform_0, window_bounds = array<i64: 40, 200>}, {transform_indices = @transform_1, window_bounds = array<i64: 200, 128>}, {transform_indices = @transform_2, window_bounds = array<i64: 1, 128>}, {transform_indices = @transform_3, window_bounds = array<i64: 1, 128>}, {transform_indices = @transform_4, window_bounds = array<i64: 40, 128>}]} {
    %c0_i32 = arith.constant 0 : i32
    %0 = arith.cmpi eq, %arg2, %c0_i32 : i32
    %1 = arith.extui %0 : i1 to i32
    %c0_i32_0 = arith.constant 0 : i32
    %2 = arith.cmpi ne, %1, %c0_i32_0 : i32
    scf.if %2 {
      %cst_10 = arith.constant 0.000000e+00 : f32
      %12 = vector.broadcast %cst_10 : f32 to vector<40x128xf32>
      %c0_11 = arith.constant 0 : index
      %c0_12 = arith.constant 0 : index
      %13 = vector.load %arg8[%c0_11, %c0_12] : memref<40x128xf32, #tpu.memory_space<vmem>>, vector<40x128xf32>
      tpu.vector_store %arg8[%c0_11, %c0_12], %12 {strides = array<i32>} : memref<40x128xf32, #tpu.memory_space<vmem>>, vector<40x128xf32>,
    } else {
    }
    %c0 = arith.constant 0 : index
    %c0_1 = arith.constant 0 : index
    %3 = vector.load %arg8[%c0, %c0_1] : memref<40x128xf32, #tpu.memory_space<vmem>>, vector<40x128xf32>
    %c0_2 = arith.constant 0 : index
    %c0_3 = arith.constant 0 : index
    %4 = vector.load %arg3[%c0_2, %c0_3] : memref<40x200xbf16, #tpu.memory_space<vmem>>, vector<40x200xbf16>
    %c0_4 = arith.constant 0 : index
    %c0_5 = arith.constant 0 : index
    %5 = vector.load %arg4[%c0_4, %c0_5] : memref<200x128xbf16, #tpu.memory_space<vmem>>, vector<200x128xbf16>
    %cst = arith.constant dense<0.000000e+00> : vector<40x128xf32>
    %6 = tpu.matmul %4, %5, %cst {dimension_numbers = #tpu.dot_dimension_numbers<[1], [0], [0], [1], [0, 0, 1, 1], [], []>} : vector<40x200xbf16>, vector<200x128xbf16>, vector<40x128xf32> -> vector<40x128xf32>
    %7 = arith.addf %3, %6 : vector<40x128xf32>
    %c0_6 = arith.constant 0 : index
    %c0_7 = arith.constant 0 : index
    %8 = vector.load %arg8[%c0_6, %c0_7] : memref<40x128xf32, #tpu.memory_space<vmem>>, vector<40x128xf32>
    tpu.vector_store %arg8[%c0_6, %c0_7], %7 {strides = array<i32>} : memref<40x128xf32, #tpu.memory_space<vmem>>, vector<40x128xf32>,
    %c0_i32_8 = arith.constant 0 : i32
    %9 = arith.cmpi eq, %arg2, %c0_i32_8 : i32
    %10 = arith.extui %9 : i1 to i32
    %c0_i32_9 = arith.constant 0 : i32
    %11 = arith.cmpi ne, %10, %c0_i32_9 : i32
    scf.if %11 {
      %c0_10 = arith.constant 0 : index
      %c0_11 = arith.constant 0 : index
      %12 = vector.load %arg8[%c0_10, %c0_11] : memref<40x128xf32, #tpu.memory_space<vmem>>, vector<40x128xf32>
      %c0_12 = arith.constant 0 : index
      %c0_13 = arith.constant 0 : index
      %13 = vector.load %arg5[%c0_12, %c0_13] : memref<1x128xf32, #tpu.memory_space<vmem>>, vector<1x128xf32>
      %14 = vector.broadcast %13 : vector<1x128xf32> to vector<40x128xf32>
      %15 = arith.mulf %12, %14 : vector<40x128xf32>
      %c0_14 = arith.constant 0 : index
      %c0_15 = arith.constant 0 : index
      %16 = vector.load %arg6[%c0_14, %c0_15] : memref<1x128xf32, #tpu.memory_space<vmem>>, vector<1x128xf32>
      %17 = vector.broadcast %16 : vector<1x128xf32> to vector<40x128xf32>
      %18 = arith.addf %15, %17 : vector<40x128xf32>
      %cst_16 = arith.constant 0.000000e+00 : f32
      %19 = vector.broadcast %cst_16 : f32 to vector<40x128xf32>
      %20 = arith.maximumf %18, %19 : vector<40x128xf32>
      %c0_17 = arith.constant 0 : index
      %c0_18 = arith.constant 0 : index
      %21 = vector.load %arg7[%c0_17, %c0_18] : memref<40x128xf32, #tpu.memory_space<vmem>>, vector<40x128xf32>
      tpu.vector_store %arg7[%c0_17, %c0_18], %20 {strides = array<i32>} : memref<40x128xf32, #tpu.memory_space<vmem>>, vector<40x128xf32>,
    } else {
    }
    return
  }
  func.func @transform_0(%arg0: i32, %arg1: i32, %arg2: i32) -> (i32, i32) {
    %c0_i32 = arith.constant 0 : i32
    return %arg0, %arg2 : i32, i32
  }
  func.func @transform_1(%arg0: i32, %arg1: i32, %arg2: i32) -> (i32, i32) {
    %c0_i32 = arith.constant 0 : i32
    return %arg2, %arg1 : i32, i32
  }
  func.func @transform_2(%arg0: i32, %arg1: i32, %arg2: i32) -> (i32, i32) {
    %c0_i32 = arith.constant 0 : i32
    %c0_i32_0 = arith.constant 0 : i32
    return %c0_i32, %arg1 : i32, i32
  }
  func.func @transform_3(%arg0: i32, %arg1: i32, %arg2: i32) -> (i32, i32) {
    %c0_i32 = arith.constant 0 : i32
    %c0_i32_0 = arith.constant 0 : i32
    return %c0_i32, %arg1 : i32, i32
  }
  func.func @transform_4(%arg0: i32, %arg1: i32, %arg2: i32) -> (i32, i32) {
    %c0_i32 = arith.constant 0 : i32
    return %arg0, %arg1 : i32, i32
  }
}

</mosaic_0001>

<llo_original>
// kernel: tpu_custom_call.1
$region0: #{tpu_custom_call.1}
  #allocation0 [shape = 'u32[]', space=smem, size = 0x4, offset = 0x4, fixed_abs, tag = 'smem constant byte address 0x4 - core index']
  #allocation1 [shape = 'u32[144,128]{1,0:T(1,128)}', space=vmem, size = 0x12000, scoped, tag = 'internal scratch']
  #allocation2 [shape = 'f32[40,128]{1,0:T(8,128)}', space=vmem, size = 0x5000, scoped, tag = 'scratch operand']
  %s0 = inlined_call_operand.hbm [shape: bf16[40,200], index: 0, kind: input, shape index: {}]
  %s1 = inlined_call_operand.hbm [shape: bf16[200,128], index: 1, kind: input, shape index: {}]
  %s2 = inlined_call_operand.vmem [shape: f32[1,128], index: 2, kind: input, shape index: {}]
  %s3 = inlined_call_operand.vmem [shape: f32[1,128], index: 3, kind: input, shape index: {}]
  %s4 = inlined_call_operand.hbm [shape: f32[40,128], index: 4, kind: output, shape index: {}]
  %s5 = sld [smem:[#allocation0]]
  $region42: #{tpu_custom_call.1} parent=0
    _
  %s7 = ssub.s32 1, %s5
  %s8 = scalar_select 0, %s7, %s5
  $region1: #{tpu_custom_call.1} parent=0
    #allocation3 [shape = 'u8[20480]{0}', space=vmem, size = 0x5000, scoped, tag = 'input window, operand 0, single buffered']
    #allocation4 [shape = 's32[1]{0}', space=sflag, size = 0x4, scoped, tag = 'scoped memory for tpu_custom_call.1']
    #allocation5 [shape = 's32[1]{0}', space=sflag, size = 0x4, scoped, tag = 'scoped memory for tpu_custom_call.1']
    #allocation6 [shape = 'u8[51200]{0}', space=vmem, size = 0xc800, scoped, tag = 'input window, operand 1, single buffered']
    #allocation7 [shape = 's32[1]{0}', space=sflag, size = 0x4, scoped, tag = 'scoped memory for tpu_custom_call.1']
    #allocation8 [shape = 'u8[20480]{0}', space=vmem, size = 0x5000, scoped, tag = 'output window, operand 0, single buffered']
    %9 = vsyncpa [#allocation4], 0
    %10 = vsyncpa [#allocation7], 0
    %11 = vsyncpa [#allocation5], 0
    // Predicated region
    $region2: #{tpu_custom_call.1} parent=1 // pred_check
      _
    $region3: #{tpu_custom_call.1} parent=1 // pred_check_branch
      %13 = sbr.rel (0) target = $region5
    $region4: #{tpu_custom_call.1} parent=1 // pred_region
      %s15 = ssub.s32 640, 640
      %16 = vsyncadd [#allocation4], %s15
      %s17 = sshll.u32 [#allocation3], 4
      %s18 = int_to_ptr.vmem [resolvable:$true] %s17
      %23 = dma.hbm_to_vmem [thread:$0]  %s0, 640, %s18, [#allocation4], 128, 128, 8
    $region5: #{tpu_custom_call.1} parent=1 // pred_fallthru
      _
    // Predicated region
    $region6: #{tpu_custom_call.1} parent=1 // pred_check
      _
    $region7: #{tpu_custom_call.1} parent=1 // pred_check_branch
      %25 = sbr.rel (0) target = $region9
    $region8: #{tpu_custom_call.1} parent=1 // pred_region
      %s27 = ssub.s32 1600, 1600
      %28 = vsyncadd [#allocation7], %s27
      %s29 = sshll.u32 [#allocation6], 4
      %s30 = int_to_ptr.vmem [resolvable:$true] %s29
      %35 = dma.hbm_to_vmem [thread:$0]  %s1, 1600, %s30, [#allocation7], 64, 64, 4
    $region9: #{tpu_custom_call.1} parent=1 // pred_fallthru
      _
    // Predicated region
    $region10: #{tpu_custom_call.1} parent=1 // pred_check
      _
    $region11: #{tpu_custom_call.1} parent=1 // pred_check_branch
      %37 = sbr.rel (0) target = $region13
    $region12: #{tpu_custom_call.1} parent=1 // pred_region
      _
    $region13: #{tpu_custom_call.1} parent=1 // pred_fallthru
      _
    // Predicated region
    $region14: #{tpu_custom_call.1} parent=1 // pred_check
      _
    $region15: #{tpu_custom_call.1} parent=1 // pred_check_branch
      %39 = sbr.rel (0) target = $region17
    $region16: #{tpu_custom_call.1} parent=1 // pred_region
      _
    $region17: #{tpu_custom_call.1} parent=1 // pred_fallthru
      _
    // Predicated region
    $region18: #{tpu_custom_call.1} parent=1 // pred_check
      _
    $region19: #{tpu_custom_call.1} parent=1 // pred_check_branch
      %41 = sbr.rel (0) target = $region21
    $region20: #{tpu_custom_call.1} parent=1 // pred_region
      %42 = dma.done [#allocation4], 640
    $region21: #{tpu_custom_call.1} parent=1 // pred_fallthru
      _
    // Predicated region
    $region22: #{tpu_custom_call.1} parent=1 // pred_check
      _
    $region23: #{tpu_custom_call.1} parent=1 // pred_check_branch
      %44 = sbr.rel (0) target = $region25
    $region24: #{tpu_custom_call.1} parent=1 // pred_region
      %45 = dma.done [#allocation7], 1600
    $region25: #{tpu_custom_call.1} parent=1 // pred_fallthru
      _
    %p47 = scmp.eq.s32.totalorder 0, 0
    // Predicated region
    $region26: #{tpu_custom_call.1} parent=1 // pred_check
      %p48 = pneg %p47
    $region27: #{tpu_custom_call.1} parent=1 // pred_check_branch
      %50 = sbr.rel (%p48) target = $region29
    $region28: #{tpu_custom_call.1} parent=1 // pred_region
      %51 = vst [vmem:[#allocation2] sm:$0xff] 0.0
      %52 = vst [vmem:[#allocation2 + $0x8] sm:$0xff] 0.0
      %53 = vst [vmem:[#allocation2 + $0x10] sm:$0xff] 0.0
      %54 = vst [vmem:[#allocation2 + $0x18] sm:$0xff] 0.0
      %55 = vst [vmem:[#allocation2 + $0x20] sm:$0xff] 0.0
    $region29: #{tpu_custom_call.1} parent=1 // pred_fallthru
      _
    %v56 = vld [vmem:[#allocation2] sm:$0xff]
    %v57 = vld [vmem:[#allocation2 + $0x8] sm:$0xff]
    %v58 = vld [vmem:[#allocation2 + $0x10] sm:$0xff]
    %v59 = vld [vmem:[#allocation2 + $0x18] sm:$0xff]
    %v60 = vld [vmem:[#allocation2 + $0x20] sm:$0xff]
    %v61 = vld [vmem:[#allocation3] sm:$0xff]
    %v62 = vld [vmem:[#allocation3 + $0x8] sm:$0xff]
    %v63 = vld [vmem:[#allocation3 + $0x10] sm:$0xff]
    %v64 = vld [vmem:[#allocation3 + $0x18] sm:$0xff]
    %v65 = vld [vmem:[#allocation3 + $0x20] sm:$0xff]
    %v66 = vld [vmem:[#allocation6] sm:$0xf]
    %v67 = vld [vmem:[#allocation6 + $0x4] sm:$0xf]
    %v68 = vld [vmem:[#allocation6 + $0x8] sm:$0xf]
    %v69 = vld [vmem:[#allocation6 + $0xc] sm:$0xf]
    %v70 = vld [vmem:[#allocation6 + $0x10] sm:$0xf]
    %v71 = vld [vmem:[#allocation6 + $0x14] sm:$0xf]
    %v72 = vld [vmem:[#allocation6 + $0x18] sm:$0xf]
    %v73 = vld [vmem:[#allocation6 + $0x1c] sm:$0xf]
    %v74 = vld [vmem:[#allocation6 + $0x20] sm:$0xf]
    %v75 = vld [vmem:[#allocation6 + $0x24] sm:$0xf]
    %v76 = vld [vmem:[#allocation6 + $0x28] sm:$0xf]
    %v77 = vld [vmem:[#allocation6 + $0x2c] sm:$0xf]
    %v78 = vld [vmem:[#allocation6 + $0x30] sm:$0xf]
    %v79 = vld [vmem:[#allocation6 + $0x34] sm:$0xf]
    %v80 = vld [vmem:[#allocation6 + $0x38] sm:$0xf]
    %v81 = vld [vmem:[#allocation6 + $0x3c] sm:$0xf]
    %v82 = vld [vmem:[#allocation6 + $0x40] sm:$0xf]
    %v83 = vld [vmem:[#allocation6 + $0x44] sm:$0xf]
    %v84 = vld [vmem:[#allocation6 + $0x48] sm:$0xf]
    %v85 = vld [vmem:[#allocation6 + $0x4c] sm:$0xf]
    %v86 = vld [vmem:[#allocation6 + $0x50] sm:$0xf]
    %v87 = vld [vmem:[#allocation6 + $0x54] sm:$0xf]
    %v88 = vld [vmem:[#allocation6 + $0x58] sm:$0xf]
    %v89 = vld [vmem:[#allocation6 + $0x5c] sm:$0xf]
    %v90 = vld [vmem:[#allocation6 + $0x60] sm:$0xf]
    %v96 = vunpack.c.l.b16 %v61
    %v97 = vunpack.c.h.b16 %v61
    %v98 = vunpack.c.l.b16 %v62
    %v99 = vunpack.c.h.b16 %v62
    %v100 = vunpack.c.l.b16 %v63
    %v101 = vunpack.c.h.b16 %v63
    %v102 = vunpack.c.l.b16 %v64
    %v103 = vunpack.c.h.b16 %v64
    %v104 = vunpack.c.l.b16 %v65
    %v105 = vunpack.c.h.b16 %v65
    %v106 = vpack.c.b16 %v98, %v96
    %v107 = vpack.c.b16 %v99, %v97
    %v108 = vpack.c.b16 %v102, %v100
    %v109 = vpack.c.b16 %v103, %v101
    %v110 = vpack.c.b16 %v104, %v104
    %v111 = vpack.c.b16 %v105, %v105
    %v140 = vunpack.c.l.b16 %v66
    %v141 = vunpack.c.l.b16 %v67
    %v142 = vunpack.c.l.b16 %v68
    %v143 = vunpack.c.l.b16 %v69
    %v144 = vunpack.c.l.b16 %v70
    %v145 = vunpack.c.l.b16 %v71
    %v146 = vunpack.c.l.b16 %v72
    %v147 = vunpack.c.l.b16 %v73
    %v148 = vunpack.c.l.b16 %v74
    %v149 = vunpack.c.l.b16 %v75
    %v150 = vunpack.c.l.b16 %v76
    %v151 = vunpack.c.l.b16 %v77
    %v152 = vunpack.c.l.b16 %v78
    %v153 = vunpack.c.l.b16 %v79
    %v154 = vunpack.c.l.b16 %v80
    %v155 = vunpack.c.l.b16 %v81
    %v156 = vunpack.c.l.b16 %v82
    %v157 = vunpack.c.l.b16 %v83
    %v158 = vunpack.c.l.b16 %v84
    %v159 = vunpack.c.l.b16 %v85
    %v160 = vunpack.c.l.b16 %v86
    %v161 = vunpack.c.l.b16 %v87
    %v162 = vunpack.c.l.b16 %v88
    %v163 = vunpack.c.l.b16 %v89
    %v164 = vunpack.c.l.b16 %v90
    %v165 = vpack.c.b16 %v141, %v140
    %v166 = vpack.c.b16 %v143, %v142
    %v167 = vpack.c.b16 %v145, %v144
    %v168 = vpack.c.b16 %v147, %v146
    %v169 = vpack.c.b16 %v149, %v148
    %v170 = vpack.c.b16 %v151, %v150
    %v171 = vpack.c.b16 %v153, %v152
    %v172 = vpack.c.b16 %v155, %v154
    %v173 = vpack.c.b16 %v157, %v156
    %v174 = vpack.c.b16 %v159, %v158
    %v175 = vpack.c.b16 %v161, %v160
    %v176 = vpack.c.b16 %v163, %v162
    %v177 = vpack.c.b16 %v164, %v164
    %vm190 = vcmask 588800
    %v192 = vsel %vm190, %v107, 0
    %v195 = vsel %vm190, %v109, 0
    %v198 = vsel %vm190, %v111, 0
    %vm200 = vcmask 1043456
    %v202 = vsel %vm200, %v177, 0
    %204 = vmatprep.subr.bf16.mxu0 0
    %205 = vmatpush1.bf16.msra.mxu0 %v165
    %206 = vmatprep.subr.bf16.mxu0 0
    %207 = vmatpush1.bf16.msra.mxu0 %v166
    %208 = vmatprep.subr.bf16.mxu0 0
    %209 = vmatpush1.bf16.msra.mxu0 %v167
    %210 = vmatprep.subr.bf16.mxu0 0
    %211 = vmatpush1.bf16.msra.mxu0 %v168
    %212 = vmatprep.subr.bf16.mxu0 0
    %213 = vmatpush1.bf16.msra.mxu0 %v169
    %214 = vmatprep.subr.bf16.mxu0 0
    %215 = vmatpush1.bf16.msra.mxu0 %v170
    %216 = vmatprep.subr.bf16.mxu0 0
    %217 = vmatpush1.bf16.msra.mxu0 %v171
    %218 = vmatprep.subr.bf16.mxu0 0
    %219 = vmatpush1.bf16.msra.mxu0 %v172
    %220 = vmatprep.subr.bf16.mxu0 0
    %221 = vmatpush1.bf16.msra.mxu0 %v173
    %222 = vmatprep.subr.bf16.mxu0 0
    %223 = vmatpush1.bf16.msra.mxu0 %v174
    %224 = vmatprep.subr.bf16.mxu0 0
    %225 = vmatpush1.bf16.msra.mxu0 %v175
    %226 = vmatprep.subr.bf16.mxu0 0
    %227 = vmatpush1.bf16.msra.mxu0 %v176
    %228 = vmatprep.subr.bf16.mxu0 0
    %229 = vmatpush1.bf16.msra.mxu0 %v202
    %230 = vmatprep.subr.bf16.mxu0 0
    %231 = vmatpush1.bf16.msra.mxu0 0
    %232 = vmatprep.subr.bf16.mxu0 0
    %233 = vmatpush1.bf16.msra.mxu0 0
    %234 = vmatprep.subr.bf16.mxu0 0
    %235 = vmatpush1.bf16.msra.mxu0 0
    %236 = vmatprep.mubr.bf16.mxu0 %v192
    %237 = vmatmul.mubr.bf16.gmra.mrb[0].mxu0 %v106
    %v238 = vpop.f32.mrb[0].mxu0
    %v239 = vadd.f32 0.0, %v238
    %v240 = vpop.f32.mrb[0].mxu0
    %v241 = vpop.f32.mrb[0].mxu0
    %v242 = vadd.f32 0.0, %v241
    %v243 = vpop.f32.mrb[0].mxu0
    %244 = vmatprep.mubr.bf16.mxu0 %v195
    %245 = vmatmul.mubr.bf16.gmra.mrb[0].mxu0 %v108
    %v246 = vpop.f32.mrb[0].mxu0
    %v247 = vadd.f32 0.0, %v246
    %v248 = vpop.f32.mrb[0].mxu0
    %v249 = vpop.f32.mrb[0].mxu0
    %v250 = vadd.f32 0.0, %v249
    %v251 = vpop.f32.mrb[0].mxu0
    %252 = vmatprep.mubr.bf16.mxu0 %v198
    %253 = vmatmul.mubr.bf16.gmra.mrb[0].mxu0 %v110
    %v254 = vpop.f32.mrb[0].mxu0
    %v255 = vadd.f32 0.0, %v254
    %v256 = vpop.f32.mrb[0].mxu0
    %v257 = vpop.f32.mrb[0].mxu0
    %v258 = vpop.f32.mrb[0].mxu0
    %259 = vdwg.mxu0
    %v260 = vadd.f32 %v56, %v239
    %v261 = vadd.f32 %v57, %v242
    %v262 = vadd.f32 %v58, %v247
    %v263 = vadd.f32 %v59, %v250
    %v264 = vadd.f32 %v60, %v255
    %265 = vst [vmem:[#allocation2] sm:$0xff] %v260
    %266 = vst [vmem:[#allocation2 + $0x8] sm:$0xff] %v261
    %267 = vst [vmem:[#allocation2 + $0x10] sm:$0xff] %v262
    %268 = vst [vmem:[#allocation2 + $0x18] sm:$0xff] %v263
    %269 = vst [vmem:[#allocation2 + $0x20] sm:$0xff] %v264
    // Predicated region
    $region30: #{tpu_custom_call.1} parent=1 // pred_check
      %p270 = pneg %p47
    $region31: #{tpu_custom_call.1} parent=1 // pred_check_branch
      %272 = sbr.rel (%p270) target = $region33
    $region32: #{tpu_custom_call.1} parent=1 // pred_region
      %v273 = vld [vmem:[#allocation2] sm:$0xff]
      %v274 = vld [vmem:[#allocation2 + $0x8] sm:$0xff]
      %v275 = vld [vmem:[#allocation2 + $0x10] sm:$0xff]
      %v276 = vld [vmem:[#allocation2 + $0x18] sm:$0xff]
      %v277 = vld [vmem:[#allocation2 + $0x20] sm:$0xff]
      %v278 = vld [vmem:[%s2] sm:$0x1]
      %v280 = vlaneseq
      %v281 = vshrl.u32 %v280, 7
      %v282 = vsub.s32 0, %v281
      %v283 = vrot.slane %v278, %v282
      %v285 = vmul.f32 %v273, %v283
      %v286 = vmul.f32 %v274, %v283
      %v287 = vmul.f32 %v275, %v283
      %v288 = vmul.f32 %v276, %v283
      %v289 = vmul.f32 %v277, %v283
      %v290 = vld [vmem:[%s3] sm:$0x1]
      %v292 = vlaneseq
      %v293 = vshrl.u32 %v292, 7
      %v294 = vsub.s32 0, %v293
      %v295 = vrot.slane %v290, %v294
      %v297 = vadd.f32 %v285, %v295
      %v298 = vadd.f32 %v286, %v295
      %v299 = vadd.f32 %v287, %v295
      %v300 = vadd.f32 %v288, %v295
      %v301 = vadd.f32 %v289, %v295
      %v302 = vmax.f32 %v297, 0.0
      %v303 = vmax.f32 %v298, 0.0
      %v304 = vmax.f32 %v299, 0.0
      %v305 = vmax.f32 %v300, 0.0
      %v306 = vmax.f32 %v301, 0.0
      %307 = vst [vmem:[#allocation8] sm:$0xff] %v302
      %308 = vst [vmem:[#allocation8 + $0x8] sm:$0xff] %v303
      %309 = vst [vmem:[#allocation8 + $0x10] sm:$0xff] %v304
      %310 = vst [vmem:[#allocation8 + $0x18] sm:$0xff] %v305
      %311 = vst [vmem:[#allocation8 + $0x20] sm:$0xff] %v306
    $region33: #{tpu_custom_call.1} parent=1 // pred_fallthru
      _
    // Predicated region
    $region34: #{tpu_custom_call.1} parent=1 // pred_check
      _
    $region35: #{tpu_custom_call.1} parent=1 // pred_check_branch
      %313 = sbr.rel (0) target = $region37
    $region36: #{tpu_custom_call.1} parent=1 // pred_region
      %s315 = ssub.s32 640, 640
      %316 = vsyncadd [#allocation5], %s315
      %s317 = sshll.u32 [#allocation8], 4
      %s318 = int_to_ptr.vmem [resolvable:$true] %s317
      %323 = dma.vmem_to_hbm [thread:$0]  %s318, 640, %s4, [#allocation5], 128, 128, 8
    $region37: #{tpu_custom_call.1} parent=1 // pred_fallthru
      _
    // Predicated region
    $region38: #{tpu_custom_call.1} parent=1 // pred_check
      _
    $region39: #{tpu_custom_call.1} parent=1 // pred_check_branch
      %325 = sbr.rel (0) target = $region41
    $region40: #{tpu_custom_call.1} parent=1 // pred_region
      %326 = dma.done [#allocation5], 640
    $region41: #{tpu_custom_call.1} parent=1 // pred_fallthru
      _
    %327 = vsyncpa [#allocation4], 1
    %328 = vsyncpa [#allocation7], 1
    %329 = vsyncpa [#allocation5], 1

</llo_original>
